<compile_context>
chip_gen: v7x
topology: tpu7x:2x2x1
jax: 0.10.0
libtpu: 0.0.40
codegen_flags: <defaults>
</compile_context>

<pallas_src>
import functools

import jax
import jax.numpy as jnp
from jax.experimental import pallas as pl
from jax.experimental.pallas import tpu as pltpu


def _round_up(x: int, m: int) -> int:
    return (x + m - 1) // m * m


def _choose_block_n(n_pad: int, cap: int = 4224, min_steps: int = 2) -> int:
    """Largest lane-aligned divisor of n_pad that is <= cap, preferring at
    least `min_steps` grid steps along N (keeps both v7x TensorCores busy)."""
    nb = n_pad // 128
    best = 128
    for tb in range(1, nb + 1):
        tn = tb * 128
        if tn > cap:
            break
        if nb % tb:
            continue
        if nb >= min_steps and (nb // tb) < min_steps:
            continue
        best = tn
    return best


def _is_in_box_and_center_kernel(x1_ref, y1_ref, x2_ref, y2_ref, cx_ref, cy_ref,
                                 ax_ref, ay_ref, rad_ref, out_ref, *,
                                 clamp_max: float, full_clamp: bool):
    # Per-GT scalars: (TG, 1) columns (no in-kernel lane slices needed).
    x1 = x1_ref[...]
    y1 = y1_ref[...]
    x2 = x2_ref[...]
    y2 = y2_ref[...]
    cx = cx_ref[...]
    cy = cy_ref[...]

    # Per-anchor values: (1, TN) along the lane dim.
    ax = ax_ref[...]
    ay = ay_ref[...]
    rad = rad_ref[...]

    # point_in_box(points, gt_box): strict inequality on min of 4 deltas.
    d = jnp.minimum(jnp.minimum(ax - x1, ay - y1),
                    jnp.minimum(x2 - ax, y2 - ay))          # (TG, TN)

    # GT center box per anchor (radius depends on the anchor's level).
    # The lower clamp matters for anchors sitting at coordinate 0.
    cbx1 = jnp.maximum(cx - rad, 0.0)
    cby1 = jnp.maximum(cy - rad, 0.0)
    cbx2 = cx + rad
    cby2 = cy + rad
    if full_clamp:
        # Only needed if some anchor coordinate could reach the hard-coded
        # 640 clamp; statically decided on the host, normally False.
        cbx1 = jnp.minimum(cbx1, clamp_max)
        cby1 = jnp.minimum(cby1, clamp_max)
        cbx2 = jnp.clip(cbx2, 0.0, clamp_max)
        cby2 = jnp.clip(cby2, 0.0, clamp_max)

    e = jnp.minimum(jnp.minimum(ax - cbx1, ay - cby1),
                    jnp.minimum(cbx2 - ax, cby2 - ay))       # (TG, TN)

    # Fused mask: (d > 0) * (e > 0)  ==  min(d, e) > 0.
    out_ref[...] = (jnp.minimum(d, e) > 0.0).astype(out_ref.dtype)


class IsInBoxAndCenterBox:
    """JAX/Pallas port of the PyTorch IsInBoxAndCenterBox module."""

    def __init__(self, radius: float = 2.5, img_size: int = 640,
                 img_shrink_rate=(8, 16, 32)):
        pts = []
        rads = []
        for rate in img_shrink_rate:
            num = img_size // rate
            # YOLOVXTool.get_grid -> (num, num, 2) of (x, y) grid indices
            ys, xs = jnp.meshgrid(jnp.arange(num), jnp.arange(num), indexing="ij")
            grid = jnp.stack([xs, ys], axis=-1).reshape(-1, 2).astype(jnp.float32)
            pts.append(grid * float(rate))
            rads.append(jnp.full((grid.shape[0],), radius * rate, jnp.float32))
        self.anchor_point_on_image = jnp.concatenate(pts, axis=0)   # (N, 2)
        self.radius_on_image = jnp.concatenate(rads, axis=0)        # (N,)
        # NOTE: the torch module hard-codes 640 here regardless of img_size arg.
        self.img_size = 640.0

        # Static decision: if every anchor coordinate is strictly below the
        # clamp value, the upper clamp can never flip the strict-> 0 test and
        # the lower clamp on the (cx+rad, cy+rad) side is also irrelevant.
        max_anchor = float(jnp.max(self.anchor_point_on_image))
        self._full_clamp = not (max_anchor < self.img_size)

        # Pre-pad the per-anchor arrays once (lane-major layout).
        N = self.anchor_point_on_image.shape[0]
        self._n = N
        N_pad = _round_up(N, 128)
        self._n_pad = N_pad
        self._tn = _choose_block_n(N_pad)
        self._ax = jnp.zeros((1, N_pad), jnp.float32).at[0, :N].set(
            self.anchor_point_on_image[:, 0])
        self._ay = jnp.zeros((1, N_pad), jnp.float32).at[0, :N].set(
            self.anchor_point_on_image[:, 1])
        self._rad = jnp.zeros((1, N_pad), jnp.float32).at[0, :N].set(
            self.radius_on_image)

    def __call__(self, gt_boxes: jnp.ndarray, pre_boxes: jnp.ndarray) -> jnp.ndarray:
        # pre_boxes is only used for its leading dim in the torch module.
        N, N_pad, TN = self._n, self._n_pad, self._tn
        assert pre_boxes.shape[0] == N, "pre_boxes rows must equal #anchor points"
        G = gt_boxes.shape[0]

        # Large G tiles (up to 256) so the grid is a handful of fat steps.
        TG = min(_round_up(max(G, 1), 8), 256)
        G_pad = _round_up(max(G, 1), TG)

        gt = gt_boxes.astype(jnp.float32)
        x1 = gt[:, 0]
        y1 = gt[:, 1]
        x2 = gt[:, 2]
        y2 = gt[:, 3]
        cx = (x1 + x2) * 0.5
        cy = (y1 + y2) * 0.5

        def col(v):
            return jnp.zeros((G_pad, 1), jnp.float32).at[:G, 0].set(v)

        gt_cols = [col(x1), col(y1), col(x2), col(y2), col(cx), col(cy)]

        kernel = functools.partial(_is_in_box_and_center_kernel,
                                   clamp_max=float(self.img_size),
                                   full_clamp=self._full_clamp)

        grid = (G_pad // TG, N_pad // TN)
        gt_spec = pl.BlockSpec((TG, 1), lambda i, j: (i, 0))
        anc_spec = pl.BlockSpec((1, TN), lambda i, j: (0, j))

        cost = pl.CostEstimate(
            flops=int(22 * G_pad * N_pad),
            transcendentals=0,
            bytes_accessed=int(4 * G_pad * N_pad + 4 * 3 * N_pad + 4 * 6 * G_pad),
        )

        out = pl.pallas_call(
            kernel,
            out_shape=jax.ShapeDtypeStruct((G_pad, N_pad), jnp.float32),
            grid=grid,
            in_specs=[gt_spec] * 6 + [anc_spec] * 3,
            out_specs=pl.BlockSpec((TG, TN), lambda i, j: (i, j)),
            compiler_params=pltpu.CompilerParams(
                dimension_semantics=("parallel", "parallel"),
                vmem_limit_bytes=32 * 1024 * 1024),
            cost_estimate=cost,
        )(*gt_cols, self._ax, self._ay, self._rad)

        return out[:G, :N]


def _reference(module: IsInBoxAndCenterBox, gt_boxes: jnp.ndarray) -> jnp.ndarray:
    """Pure-JAX reference mirroring the torch forward (full clamp kept)."""
    pts = module.anchor_point_on_image                    # (N, 2)
    rad = module.radius_on_image[:, None]                 # (N, 1) -> (N, 2)
    outs = []
    for i in range(gt_boxes.shape[0]):
        box = gt_boxes[i]
        d = jnp.concatenate([pts - box[None, :2], box[None, 2:] - pts], axis=-1)
        in_box = (d.min(axis=-1) > 0).astype(jnp.float32)
        center = (box[:2] + box[2:]) * 0.5
        x1y1 = center[None, :] - rad
        x2y2 = center[None, :] + rad
        cbox = jnp.clip(jnp.concatenate([x1y1, x2y2], axis=-1), 0.0, module.img_size)
        e = jnp.concatenate([pts - cbox[:, :2], cbox[:, 2:] - pts], axis=-1)
        in_center = (e.min(axis=-1) > 0).astype(jnp.float32)
        outs.append(in_box * in_center)
    return jnp.stack(outs, axis=0)


if __name__ == "__main__":
    key = jax.random.PRNGKey(0)
    img_size = 64
    shrink = (8, 16, 32)
    module = IsInBoxAndCenterBox(radius=2.5, img_size=img_size, img_shrink_rate=shrink)
    n_anchors = module.anchor_point_on_image.shape[0]     # 8^2 + 4^2 + 2^2 = 84

    # Deterministic small gt boxes inside the image: (G, 4) = [x1, y1, x2, y2]
    k1, k2, k3 = jax.random.split(key, 3)
    G = 3
    centers = jax.random.uniform(k1, (G, 2), minval=10.0, maxval=float(img_size - 10))
    sizes = jax.random.uniform(k2, (G, 2), minval=8.0, maxval=24.0)
    gt_boxes = jnp.concatenate([centers - sizes * 0.5, centers + sizes * 0.5], axis=-1)
    gt_boxes = jnp.clip(gt_boxes, 0.0, float(img_size)).astype(jnp.float32)

    # pre_boxes is semantically unused by the module; only its row count matters.
    pre_boxes = jax.random.uniform(k3, (n_anchors, 4), dtype=jnp.float32) * img_size

    out = module(gt_boxes, pre_boxes)
    out = jax.block_until_ready(out)

    ref = _reference(module, gt_boxes)
    assert out.shape == (G, n_anchors)
    assert jnp.allclose(out, ref), "Pallas output mismatch vs reference"

    print("KERNEL_OK")
</pallas_src>

<mosaic_0001>
module attributes {stable_mosaic.version = 11 : i64} {
  func.func @_is_in_box_and_center_kernel(%arg0: i32, %arg1: i32, %arg2: memref<8x1xf32, #tpu.memory_space<vmem>>, %arg3: memref<8x1xf32, #tpu.memory_space<vmem>>, %arg4: memref<8x1xf32, #tpu.memory_space<vmem>>, %arg5: memref<8x1xf32, #tpu.memory_space<vmem>>, %arg6: memref<8x1xf32, #tpu.memory_space<vmem>>, %arg7: memref<8x1xf32, #tpu.memory_space<vmem>>, %arg8: memref<1x128xf32, #tpu.memory_space<vmem>>, %arg9: memref<1x128xf32, #tpu.memory_space<vmem>>, %arg10: memref<1x128xf32, #tpu.memory_space<vmem>>, %arg11: memref<8x128xf32, #tpu.memory_space<vmem>>) attributes {dimension_semantics = [#tpu.dimension_semantics<parallel>, #tpu.dimension_semantics<parallel>], iteration_bounds = array<i64: 1, 1>, scalar_prefetch = 0 : i64, scratch_operands = 0 : i64, tpu.core_type = #tpu.core_type<tc>, window_params = [{transform_indices = @transform_0, window_bounds = array<i64: 8, 1>}, {transform_indices = @transform_1, window_bounds = array<i64: 8, 1>}, {transform_indices = @transform_2, window_bounds = array<i64: 8, 1>}, {transform_indices = @transform_3, window_bounds = array<i64: 8, 1>}, {transform_indices = @transform_4, window_bounds = array<i64: 8, 1>}, {transform_indices = @transform_5, window_bounds = array<i64: 8, 1>}, {transform_indices = @transform_6, window_bounds = array<i64: 1, 128>}, {transform_indices = @transform_7, window_bounds = array<i64: 1, 128>}, {transform_indices = @transform_8, window_bounds = array<i64: 1, 128>}, {transform_indices = @transform_9, window_bounds = array<i64: 8, 128>}]} {
    %c0 = arith.constant 0 : index
    %c0_0 = arith.constant 0 : index
    %0 = vector.load %arg2[%c0, %c0_0] : memref<8x1xf32, #tpu.memory_space<vmem>>, vector<8x1xf32>
    %c0_1 = arith.constant 0 : index
    %c0_2 = arith.constant 0 : index
    %1 = vector.load %arg3[%c0_1, %c0_2] : memref<8x1xf32, #tpu.memory_space<vmem>>, vector<8x1xf32>
    %c0_3 = arith.constant 0 : index
    %c0_4 = arith.constant 0 : index
    %2 = vector.load %arg4[%c0_3, %c0_4] : memref<8x1xf32, #tpu.memory_space<vmem>>, vector<8x1xf32>
    %c0_5 = arith.constant 0 : index
    %c0_6 = arith.constant 0 : index
    %3 = vector.load %arg5[%c0_5, %c0_6] : memref<8x1xf32, #tpu.memory_space<vmem>>, vector<8x1xf32>
    %c0_7 = arith.constant 0 : index
    %c0_8 = arith.constant 0 : index
    %4 = vector.load %arg6[%c0_7, %c0_8] : memref<8x1xf32, #tpu.memory_space<vmem>>, vector<8x1xf32>
    %c0_9 = arith.constant 0 : index
    %c0_10 = arith.constant 0 : index
    %5 = vector.load %arg7[%c0_9, %c0_10] : memref<8x1xf32, #tpu.memory_space<vmem>>, vector<8x1xf32>
    %c0_11 = arith.constant 0 : index
    %c0_12 = arith.constant 0 : index
    %6 = vector.load %arg8[%c0_11, %c0_12] : memref<1x128xf32, #tpu.memory_space<vmem>>, vector<1x128xf32>
    %c0_13 = arith.constant 0 : index
    %c0_14 = arith.constant 0 : index
    %7 = vector.load %arg9[%c0_13, %c0_14] : memref<1x128xf32, #tpu.memory_space<vmem>>, vector<1x128xf32>
    %c0_15 = arith.constant 0 : index
    %c0_16 = arith.constant 0 : index
    %8 = vector.load %arg10[%c0_15, %c0_16] : memref<1x128xf32, #tpu.memory_space<vmem>>, vector<1x128xf32>
    %9 = vector.broadcast %6 : vector<1x128xf32> to vector<8x128xf32>
    %10 = vector.broadcast %0 : vector<8x1xf32> to vector<8x128xf32>
    %11 = arith.subf %9, %10 : vector<8x128xf32>
    %12 = vector.broadcast %7 : vector<1x128xf32> to vector<8x128xf32>
    %13 = vector.broadcast %1 : vector<8x1xf32> to vector<8x128xf32>
    %14 = arith.subf %12, %13 : vector<8x128xf32>
    %15 = arith.minimumf %11, %14 : vector<8x128xf32>
    %16 = vector.broadcast %2 : vector<8x1xf32> to vector<8x128xf32>
    %17 = vector.broadcast %6 : vector<1x128xf32> to vector<8x128xf32>
    %18 = arith.subf %16, %17 : vector<8x128xf32>
    %19 = vector.broadcast %3 : vector<8x1xf32> to vector<8x128xf32>
    %20 = vector.broadcast %7 : vector<1x128xf32> to vector<8x128xf32>
    %21 = arith.subf %19, %20 : vector<8x128xf32>
    %22 = arith.minimumf %18, %21 : vector<8x128xf32>
    %23 = arith.minimumf %15, %22 : vector<8x128xf32>
    %24 = vector.broadcast %4 : vector<8x1xf32> to vector<8x128xf32>
    %25 = vector.broadcast %8 : vector<1x128xf32> to vector<8x128xf32>
    %26 = arith.subf %24, %25 : vector<8x128xf32>
    %cst = arith.constant 0.000000e+00 : f32
    %27 = vector.broadcast %cst : f32 to vector<8x128xf32>
    %28 = arith.maximumf %26, %27 : vector<8x128xf32>
    %29 = vector.broadcast %5 : vector<8x1xf32> to vector<8x128xf32>
    %30 = vector.broadcast %8 : vector<1x128xf32> to vector<8x128xf32>
    %31 = arith.subf %29, %30 : vector<8x128xf32>
    %cst_17 = arith.constant 0.000000e+00 : f32
    %32 = vector.broadcast %cst_17 : f32 to vector<8x128xf32>
    %33 = arith.maximumf %31, %32 : vector<8x128xf32>
    %34 = vector.broadcast %4 : vector<8x1xf32> to vector<8x128xf32>
    %35 = vector.broadcast %8 : vector<1x128xf32> to vector<8x128xf32>
    %36 = arith.addf %34, %35 : vector<8x128xf32>
    %37 = vector.broadcast %5 : vector<8x1xf32> to vector<8x128xf32>
    %38 = vector.broadcast %8 : vector<1x128xf32> to vector<8x128xf32>
    %39 = arith.addf %37, %38 : vector<8x128xf32>
    %40 = vector.broadcast %6 : vector<1x128xf32> to vector<8x128xf32>
    %41 = arith.subf %40, %28 : vector<8x128xf32>
    %42 = vector.broadcast %7 : vector<1x128xf32> to vector<8x128xf32>
    %43 = arith.subf %42, %33 : vector<8x128xf32>
    %44 = arith.minimumf %41, %43 : vector<8x128xf32>
    %45 = vector.broadcast %6 : vector<1x128xf32> to vector<8x128xf32>
    %46 = arith.subf %36, %45 : vector<8x128xf32>
    %47 = vector.broadcast %7 : vector<1x128xf32> to vector<8x128xf32>
    %48 = arith.subf %39, %47 : vector<8x128xf32>
    %49 = arith.minimumf %46, %48 : vector<8x128xf32>
    %50 = arith.minimumf %44, %49 : vector<8x128xf32>
    %51 = arith.minimumf %23, %50 : vector<8x128xf32>
    %cst_18 = arith.constant 0.000000e+00 : f32
    %52 = vector.broadcast %cst_18 : f32 to vector<8x128xf32>
    %53 = arith.cmpf ogt, %51, %52 : vector<8x128xf32>
    %54 = arith.extui %53 : vector<8x128xi1> to vector<8x128xi32>
    %55 = arith.sitofp %54 : vector<8x128xi32> to vector<8x128xf32>
    %c0_19 = arith.constant 0 : index
    %c0_20 = arith.constant 0 : index
    %56 = vector.load %arg11[%c0_19, %c0_20] : memref<8x128xf32, #tpu.memory_space<vmem>>, vector<8x128xf32>
    tpu.vector_store %arg11[%c0_19, %c0_20], %55 {strides = array<i32>} : memref<8x128xf32, #tpu.memory_space<vmem>>, vector<8x128xf32>,
    return
  }
  func.func @transform_0(%arg0: i32, %arg1: i32) -> (i32, i32) {
    %c0_i32 = arith.constant 0 : i32
    %c0_i32_0 = arith.constant 0 : i32
    return %arg0, %c0_i32 : i32, i32
  }
  func.func @transform_1(%arg0: i32, %arg1: i32) -> (i32, i32) {
    %c0_i32 = arith.constant 0 : i32
    %c0_i32_0 = arith.constant 0 : i32
    return %arg0, %c0_i32 : i32, i32
  }
  func.func @transform_2(%arg0: i32, %arg1: i32) -> (i32, i32) {
    %c0_i32 = arith.constant 0 : i32
    %c0_i32_0 = arith.constant 0 : i32
    return %arg0, %c0_i32 : i32, i32
  }
  func.func @transform_3(%arg0: i32, %arg1: i32) -> (i32, i32) {
    %c0_i32 = arith.constant 0 : i32
    %c0_i32_0 = arith.constant 0 : i32
    return %arg0, %c0_i32 : i32, i32
  }
  func.func @transform_4(%arg0: i32, %arg1: i32) -> (i32, i32) {
    %c0_i32 = arith.constant 0 : i32
    %c0_i32_0 = arith.constant 0 : i32
    return %arg0, %c0_i32 : i32, i32
  }
  func.func @transform_5(%arg0: i32, %arg1: i32) -> (i32, i32) {
    %c0_i32 = arith.constant 0 : i32
    %c0_i32_0 = arith.constant 0 : i32
    return %arg0, %c0_i32 : i32, i32
  }
  func.func @transform_6(%arg0: i32, %arg1: i32) -> (i32, i32) {
    %c0_i32 = arith.constant 0 : i32
    %c0_i32_0 = arith.constant 0 : i32
    return %c0_i32, %arg1 : i32, i32
  }
  func.func @transform_7(%arg0: i32, %arg1: i32) -> (i32, i32) {
    %c0_i32 = arith.constant 0 : i32
    %c0_i32_0 = arith.constant 0 : i32
    return %c0_i32, %arg1 : i32, i32
  }
  func.func @transform_8(%arg0: i32, %arg1: i32) -> (i32, i32) {
    %c0_i32 = arith.constant 0 : i32
    %c0_i32_0 = arith.constant 0 : i32
    return %c0_i32, %arg1 : i32, i32
  }
  func.func @transform_9(%arg0: i32, %arg1: i32) -> (i32, i32) {
    %c0_i32 = arith.constant 0 : i32
    return %arg0, %arg1 : i32, i32
  }
}

</mosaic_0001>

<llo_original>
// kernel: tpu_custom_call.1
$region0: #{tpu_custom_call.1}
  #allocation0 [shape = 'u32[]', space=smem, size = 0x4, offset = 0x4, fixed_abs, tag = 'smem constant byte address 0x4 - core index']
  #allocation1 [shape = 'u32[144,128]{1,0:T(1,128)}', space=vmem, size = 0x12000, scoped, tag = 'internal scratch']
  %s0 = inlined_call_operand.vmem [shape: f32[8,1], index: 0, kind: input, shape index: {}]
  %s1 = inlined_call_operand.vmem [shape: f32[8,1], index: 1, kind: input, shape index: {}]
  %s2 = inlined_call_operand.vmem [shape: f32[8,1], index: 2, kind: input, shape index: {}]
  %s3 = inlined_call_operand.vmem [shape: f32[8,1], index: 3, kind: input, shape index: {}]
  %s4 = inlined_call_operand.vmem [shape: f32[8,1], index: 4, kind: input, shape index: {}]
  %s5 = inlined_call_operand.vmem [shape: f32[8,1], index: 5, kind: input, shape index: {}]
  %s6 = inlined_call_operand.vmem [shape: f32[1,128], index: 6, kind: input, shape index: {}]
  %s7 = inlined_call_operand.vmem [shape: f32[1,128], index: 7, kind: input, shape index: {}]
  %s8 = inlined_call_operand.vmem [shape: f32[1,128], index: 8, kind: input, shape index: {}]
  %s9 = inlined_call_operand.hbm [shape: f32[8,128], index: 9, kind: output, shape index: {}]
  %s10 = sld [smem:[#allocation0]]
  $region46: #{tpu_custom_call.1} parent=0
    _
  %s12 = ssub.s32 1, %s10
  %s13 = scalar_select 0, %s12, %s10
  $region1: #{tpu_custom_call.1} parent=0
    #allocation2 [shape = 'u8[4096]{0}', space=vmem, size = 0x1000, scoped, tag = 'output window, operand 0, single buffered']
    #allocation3 [shape = 's32[1]{0}', space=sflag, size = 0x4, scoped, tag = 'scoped memory for tpu_custom_call.1']
    %14 = vsyncpa [#allocation3], 0
    // Predicated region
    $region2: #{tpu_custom_call.1} parent=1 // pred_check
      _
    $region3: #{tpu_custom_call.1} parent=1 // pred_check_branch
      %16 = sbr.rel (0) target = $region5
    $region4: #{tpu_custom_call.1} parent=1 // pred_region
      _
    $region5: #{tpu_custom_call.1} parent=1 // pred_fallthru
      _
    // Predicated region
    $region6: #{tpu_custom_call.1} parent=1 // pred_check
      _
    $region7: #{tpu_custom_call.1} parent=1 // pred_check_branch
      %18 = sbr.rel (0) target = $region9
    $region8: #{tpu_custom_call.1} parent=1 // pred_region
      _
    $region9: #{tpu_custom_call.1} parent=1 // pred_fallthru
      _
    // Predicated region
    $region10: #{tpu_custom_call.1} parent=1 // pred_check
      _
    $region11: #{tpu_custom_call.1} parent=1 // pred_check_branch
      %20 = sbr.rel (0) target = $region13
    $region12: #{tpu_custom_call.1} parent=1 // pred_region
      _
    $region13: #{tpu_custom_call.1} parent=1 // pred_fallthru
      _
    // Predicated region
    $region14: #{tpu_custom_call.1} parent=1 // pred_check
      _
    $region15: #{tpu_custom_call.1} parent=1 // pred_check_branch
      %22 = sbr.rel (0) target = $region17
    $region16: #{tpu_custom_call.1} parent=1 // pred_region
      _
    $region17: #{tpu_custom_call.1} parent=1 // pred_fallthru
      _
    // Predicated region
    $region18: #{tpu_custom_call.1} parent=1 // pred_check
      _
    $region19: #{tpu_custom_call.1} parent=1 // pred_check_branch
      %24 = sbr.rel (0) target = $region21
    $region20: #{tpu_custom_call.1} parent=1 // pred_region
      _
    $region21: #{tpu_custom_call.1} parent=1 // pred_fallthru
      _
    // Predicated region
    $region22: #{tpu_custom_call.1} parent=1 // pred_check
      _
    $region23: #{tpu_custom_call.1} parent=1 // pred_check_branch
      %26 = sbr.rel (0) target = $region25
    $region24: #{tpu_custom_call.1} parent=1 // pred_region
      _
    $region25: #{tpu_custom_call.1} parent=1 // pred_fallthru
      _
    // Predicated region
    $region26: #{tpu_custom_call.1} parent=1 // pred_check
      _
    $region27: #{tpu_custom_call.1} parent=1 // pred_check_branch
      %28 = sbr.rel (0) target = $region29
    $region28: #{tpu_custom_call.1} parent=1 // pred_region
      _
    $region29: #{tpu_custom_call.1} parent=1 // pred_fallthru
      _
    // Predicated region
    $region30: #{tpu_custom_call.1} parent=1 // pred_check
      _
    $region31: #{tpu_custom_call.1} parent=1 // pred_check_branch
      %30 = sbr.rel (0) target = $region33
    $region32: #{tpu_custom_call.1} parent=1 // pred_region
      _
    $region33: #{tpu_custom_call.1} parent=1 // pred_fallthru
      _
    // Predicated region
    $region34: #{tpu_custom_call.1} parent=1 // pred_check
      _
    $region35: #{tpu_custom_call.1} parent=1 // pred_check_branch
      %32 = sbr.rel (0) target = $region37
    $region36: #{tpu_custom_call.1} parent=1 // pred_region
      _
    $region37: #{tpu_custom_call.1} parent=1 // pred_fallthru
      _
    %v33 = vld [vmem:[%s0] sm:$0xff]
    %v34 = vld [vmem:[%s1] sm:$0xff]
    %v35 = vld [vmem:[%s2] sm:$0xff]
    %v36 = vld [vmem:[%s3] sm:$0xff]
    %v37 = vld [vmem:[%s4] sm:$0xff]
    %v38 = vld [vmem:[%s5] sm:$0xff]
    %v39 = vld [vmem:[%s6] sm:$0x1]
    %v40 = vld [vmem:[%s7] sm:$0x1]
    %v41 = vld [vmem:[%s8] sm:$0x1]
    %v43 = vlaneseq
    %v44 = vshrl.u32 %v43, 7
    %v45 = vsub.s32 0, %v44
    %v46 = vrot.slane %v39, %v45
    %49 = vset.pattern.permute.xlu0 0
    %50 = vperm.xlu0 %49, %v33
    %v51 = vpop.permute.xlu0 %50
    %v53 = vsub.f32 %v46, %v51
    %v55 = vlaneseq
    %v56 = vshrl.u32 %v55, 7
    %v57 = vsub.s32 0, %v56
    %v58 = vrot.slane %v40, %v57
    %61 = vset.pattern.permute.xlu0 0
    %62 = vperm.xlu0 %61, %v34
    %v63 = vpop.permute.xlu0 %62
    %v65 = vsub.f32 %v58, %v63
    %v66 = vmin.f32 %v53, %v65
    %68 = vset.pattern.permute.xlu0 0
    %69 = vperm.xlu0 %68, %v35
    %v70 = vpop.permute.xlu0 %69
    %v72 = vsub.f32 %v70, %v46
    %74 = vset.pattern.permute.xlu0 0
    %75 = vperm.xlu0 %74, %v36
    %v76 = vpop.permute.xlu0 %75
    %v78 = vsub.f32 %v76, %v58
    %v79 = vmin.f32 %v72, %v78
    %v80 = vmin.f32 %v66, %v79
    %82 = vset.pattern.permute.xlu0 0
    %83 = vperm.xlu0 %82, %v37
    %v84 = vpop.permute.xlu0 %83
    %v87 = vlaneseq
    %v88 = vshrl.u32 %v87, 7
    %v89 = vsub.s32 0, %v88
    %v90 = vrot.slane %v41, %v89
    %v92 = vsub.f32 %v84, %v90
    %v93 = vmax.f32 %v92, 0.0
    %95 = vset.pattern.permute.xlu0 0
    %96 = vperm.xlu0 %95, %v38
    %v97 = vpop.permute.xlu0 %96
    %v99 = vsub.f32 %v97, %v90
    %v100 = vmax.f32 %v99, 0.0
    %v101 = vadd.f32 %v84, %v90
    %v102 = vadd.f32 %v97, %v90
    %v103 = vsub.f32 %v46, %v93
    %v104 = vsub.f32 %v58, %v100
    %v105 = vmin.f32 %v103, %v104
    %v106 = vsub.f32 %v101, %v46
    %v107 = vsub.f32 %v102, %v58
    %v108 = vmin.f32 %v106, %v107
    %v109 = vmin.f32 %v105, %v108
    %v110 = vmin.f32 %v80, %v109
    %vm111 = vcmp.gt.f32.partialorder %v110, 0.0
    %v112 = vsel %vm111, 1, 0
    %v113 = vcvt.s32.f32 %v112
    %114 = vst [vmem:[#allocation2] sm:$0xff] %v113
    // Predicated region
    $region38: #{tpu_custom_call.1} parent=1 // pred_check
      _
    $region39: #{tpu_custom_call.1} parent=1 // pred_check_branch
      %116 = sbr.rel (0) target = $region41
    $region40: #{tpu_custom_call.1} parent=1 // pred_region
      %s118 = ssub.s32 128, 128
      %119 = vsyncadd [#allocation3], %s118
      %s121 = sshll.u32 [#allocation2], 4
      %s122 = int_to_ptr.vmem [resolvable:$true] %s121
      %124 = dma.vmem_to_hbm [thread:$0]  %s122, 128, %s9, [#allocation3]
    $region41: #{tpu_custom_call.1} parent=1 // pred_fallthru
      _
    // Predicated region
    $region42: #{tpu_custom_call.1} parent=1 // pred_check
      _
    $region43: #{tpu_custom_call.1} parent=1 // pred_check_branch
      %126 = sbr.rel (0) target = $region45
    $region44: #{tpu_custom_call.1} parent=1 // pred_region
      %127 = dma.done [#allocation3], 128
    $region45: #{tpu_custom_call.1} parent=1 // pred_fallthru
      _
    %128 = vsyncpa [#allocation3], 1

</llo_original>
